<compile_context>
chip_gen: v7x
topology: tpu7x:2x2x1
jax: 0.10.0
libtpu: 0.0.40
codegen_flags: <defaults>
</compile_context>

<pallas_src>
import jax
import jax.numpy as jnp
import numpy as np
from jax.experimental import pallas as pl
from jax.experimental.pallas import tpu as pltpu


def _round_up(x, m):
    return (x + m - 1) // m * m


def _vmem_limit():
    """3/4 of physical VMEM, capped at 100 MiB (v7x: ~48 MiB, v5e/v6e: ~96 MiB)."""
    cap = 64 * 1024 * 1024
    try:
        info = pltpu.get_tpu_info()
        cap = int(getattr(info, "vmem_capacity_bytes", cap) or cap)
    except Exception:
        pass
    return int(min(cap * 3 // 4, 100 * 1024 * 1024))


# ----------------------------------------------------------------------------
# Tiled matmul + bias, full-K (no k grid axis -> no accumulator scratch, no
# init/finalize phases, wide unmasked lane-dense output stores).  Operands are
# expected in bf16 (MXU-native), accumulation and output are f32.
# ----------------------------------------------------------------------------
def _matmul_bias_kernel(x_ref, w_ref, b_ref, o_ref):
    o_ref[...] = (jnp.dot(x_ref[...], w_ref[...],
                          preferred_element_type=jnp.float32)
                  + b_ref[...]).astype(o_ref.dtype)


def matmul_bias(x, w, b, *, tm=256, tn=512, out_dtype=jnp.float32):
    """(M, K) @ (K, N) + (1, N).  K (= E or H here) is kept whole per tile."""
    M, K = x.shape
    _, N = w.shape
    tm = min(tm, _round_up(M, 8))
    tn = min(tn, _round_up(N, 128))
    Mp, Np = _round_up(M, tm), _round_up(N, tn)
    Kp = _round_up(K, 8)

    xp = jnp.pad(x, ((0, Mp - M), (0, Kp - K)))
    wp = jnp.pad(w, ((0, Kp - K), (0, Np - N)))
    bp = jnp.pad(b.reshape(1, -1).astype(jnp.float32), ((0, 0), (0, Np - N)))

    out = pl.pallas_call(
        _matmul_bias_kernel,
        out_shape=jax.ShapeDtypeStruct((Mp, Np), out_dtype),
        grid=(Mp // tm, Np // tn),
        in_specs=[
            pl.BlockSpec((tm, Kp), lambda i, j: (i, 0)),
            pl.BlockSpec((Kp, tn), lambda i, j: (0, j)),
            pl.BlockSpec((1, tn), lambda i, j: (0, j)),
        ],
        out_specs=pl.BlockSpec((tm, tn), lambda i, j: (i, j)),
        compiler_params=pltpu.CompilerParams(
            dimension_semantics=("parallel", "parallel"),
            vmem_limit_bytes=_vmem_limit()),
    )(xp, wp, bp)
    return out[:M, :N]


# ----------------------------------------------------------------------------
# Recurrent Pallas kernel: T timesteps per grid step, all LSTM layers inside.
# h/c state is carried in VMEM scratch laid out as (Bp, L*H) so that the fused
# per-layer input [h_{l-1}^new ; h_l^old] is a single contiguous lane slice.
# Weights are bf16 (MXU-native); all gate/elementwise math stays f32.
# ----------------------------------------------------------------------------
def _make_lstm_recurrent_kernel(num_layers, hidden_dim, time_block):
    H, L, T = hidden_dim, num_layers, time_block

    def body(xg_ref,      # (T, Bp, 4H)  f32 precomputed x @ W_ih0 + b0
             wh0_ref,     # (H, 4H)      bf16 layer-0 recurrent weights
             wcat_ref,    # (L-1, 2H,4H) bf16 layers 1..L-1 [W_ih; W_hh] (or None)
             br_ref,      # (L-1, 1, 4H) f32 layers 1..L-1 biases (or None)
             htop_ref,    # (T, Bp, H)   top-layer h per timestep (out)
             hn_ref,      # (L, Bp, H)   final hidden state (out)
             cn_ref,      # (L, Bp, H)   final cell state (out)
             h_scr,       # VMEM (Bp, L*H) f32
             c_scr):      # VMEM (Bp, L*H) f32
        tb = pl.program_id(0)
        Bp = h_scr.shape[0]

        @pl.when(tb == 0)
        def _():  # hidden=None -> zero initial state
            h_scr[...] = jnp.zeros_like(h_scr)
            c_scr[...] = jnp.zeros_like(c_scr)

        # Hoist grid-invariant bias broadcasts out of the t x l loops
        # (JAX does not CSE broadcast_in_dim).
        if L > 1:
            br_b = [jnp.broadcast_to(br_ref[l - 1], (Bp, 4 * H))
                    for l in range(1, L)]

        def apply_gates(gates, c_prev):
            # PyTorch gate order i, f, g, o; H multiple of 128 keeps the
            # slices lane-aligned (pure VPU/EUP, no cross-lane relayout).
            i_g = jax.nn.sigmoid(gates[:, 0:H])
            f_g = jax.nn.sigmoid(gates[:, H:2 * H])
            g_g = jnp.tanh(gates[:, 2 * H:3 * H])
            o_g = jax.nn.sigmoid(gates[:, 3 * H:4 * H])
            c_new = f_g * c_prev + i_g * g_g
            h_new = o_g * jnp.tanh(c_new)
            return h_new, c_new

        # Static unroll over the timestep block.
        # TODO(synk): if the Mosaic dump shows spills at large T, switch to
        # lax.fori_loop(..., unroll=True) to bound live ranges.
        for t in range(T):
            # ---- layer 0: x-side gates precomputed, only the recurrent dot.
            gates0 = xg_ref[t] + jnp.dot(
                h_scr[:, 0:H].astype(jnp.bfloat16), wh0_ref[...],
                preferred_element_type=jnp.float32)
            h_new, c_new = apply_gates(gates0, c_scr[:, 0:H])
            h_scr[:, 0:H] = h_new
            c_scr[:, 0:H] = c_new

            # ---- layers 1 .. L-1: one fused dot per layer.
            for l in range(1, L):
                lo, hi = (l - 1) * H, (l + 1) * H
                inp2 = h_scr[:, lo:hi].astype(jnp.bfloat16)   # (Bp, 2H)
                gates = (jnp.dot(inp2, wcat_ref[l - 1],
                                 preferred_element_type=jnp.float32)
                         + br_b[l - 1])
                h_new, c_new = apply_gates(gates, c_scr[:, l * H:(l + 1) * H])
                h_scr[:, l * H:(l + 1) * H] = h_new
                c_scr[:, l * H:(l + 1) * H] = c_new

            # top-layer hidden for this timestep (feeds the hoisted FC stage)
            htop_ref[t] = h_new

        @pl.when(tb == pl.num_programs(0) - 1)
        def _():
            for l in range(L):
                hn_ref[l] = h_scr[:, l * H:(l + 1) * H]
                cn_ref[l] = c_scr[:, l * H:(l + 1) * H]

    if L > 1:
        def kernel(xg_ref, wh0_ref, wcat_ref, br_ref,
                   htop_ref, hn_ref, cn_ref, h_scr, c_scr):
            body(xg_ref, wh0_ref, wcat_ref, br_ref,
                 htop_ref, hn_ref, cn_ref, h_scr, c_scr)
    else:
        def kernel(xg_ref, wh0_ref, htop_ref, hn_ref, cn_ref, h_scr, c_scr):
            body(xg_ref, wh0_ref, None, None,
                 htop_ref, hn_ref, cn_ref, h_scr, c_scr)
    return kernel


# ----------------------------------------------------------------------------
# Wrapper: embedding lookup (glue) + three-stage Pallas forward.
# ----------------------------------------------------------------------------
def lstm_lm_forward(input_ids, params, time_block=16):
    emb_table = params["embedding"]                  # (V, E)
    L = params["num_layers"]
    H = params["hidden_dim"]
    V, E = emb_table.shape
    B, S = input_ids.shape

    # Pad batch to a full 8-sublane group only inside the recurrent kernel.
    Bp = _round_up(B, 8)

    # Largest block size that divides S (so no time padding is needed).
    T = 1
    for cand in range(min(time_block, S), 0, -1):
        if S % cand == 0:
            T = cand
            break

    # Embedding gather (padding_idx row of the table is zero), time-major.
    embeds = jnp.take(emb_table, input_ids, axis=0)        # (B, S, E)
    x = jnp.transpose(embeds, (1, 0, 2))                   # (S, B, E)

    # ---- Stage 1: layer-0 input projection over the REAL S*B rows only.
    wi0 = params["w_ih"][0].astype(jnp.bfloat16)           # (E, 4H)
    xg = matmul_bias(x.reshape(S * B, E).astype(jnp.bfloat16),
                     wi0, params["b"][0])                  # (S*B, 4H) f32
    xg = xg.reshape(S, B, 4 * H)
    xg = jnp.pad(xg, ((0, 0), (0, Bp - B), (0, 0)))        # (S, Bp, 4H)

    wh0 = params["w_hh"][0].astype(jnp.bfloat16)           # (H, 4H)

    in_specs = [
        pl.BlockSpec((T, Bp, 4 * H), lambda t: (t, 0, 0)),
        # Grid-invariant weights: single buffer, no wasted double-buffering.
        pl.BlockSpec((H, 4 * H), lambda t: (0, 0),
                     pipeline_mode=pl.Buffered(1)),
    ]
    args = [xg, wh0]
    if L > 1:
        wcat = jnp.stack([
            jnp.concatenate([params["w_ih"][l], params["w_hh"][l]], axis=0)
            for l in range(1, L)]).astype(jnp.bfloat16)     # (L-1, 2H, 4H)
        br = jnp.stack(params["b"][1:])                     # (L-1, 1, 4H)
        in_specs += [
            pl.BlockSpec((L - 1, 2 * H, 4 * H), lambda t: (0, 0, 0),
                         pipeline_mode=pl.Buffered(1)),
            pl.BlockSpec((L - 1, 1, 4 * H), lambda t: (0, 0, 0),
                         pipeline_mode=pl.Buffered(1)),
        ]
        args += [wcat, br]

    # ---- Stage 2: recurrent kernel (T timesteps per grid step).
    kernel = _make_lstm_recurrent_kernel(L, H, T)
    h_top, h_n, c_n = pl.pallas_call(
        kernel,
        out_shape=(
            jax.ShapeDtypeStruct((S, Bp, H), jnp.float32),
            jax.ShapeDtypeStruct((L, Bp, H), jnp.float32),
            jax.ShapeDtypeStruct((L, Bp, H), jnp.float32),
        ),
        grid=(S // T,),
        in_specs=in_specs,
        out_specs=(
            pl.BlockSpec((T, Bp, H), lambda t: (t, 0, 0)),
            pl.BlockSpec((L, Bp, H), lambda t: (0, 0, 0)),
            pl.BlockSpec((L, Bp, H), lambda t: (0, 0, 0)),
        ),
        scratch_shapes=[
            pltpu.VMEM((Bp, L * H), jnp.float32),
            pltpu.VMEM((Bp, L * H), jnp.float32),
        ],
        compiler_params=pltpu.CompilerParams(
            dimension_semantics=("arbitrary",),
            vmem_limit_bytes=_vmem_limit()),
    )(*args)

    # ---- Stage 3: transpose the SMALL (S,B,H) activations to batch-major
    # first (V/H times cheaper than transposing logits), then project the
    # real rows only with a full-K bf16 tiled matmul (vocab tiled over N).
    h_bt = jnp.transpose(h_top[:, :B], (1, 0, 2))           # (B, S, H)
    w_fc = params["w_fc"].astype(jnp.bfloat16)               # (H, V)
    # TODO(synk): emit logits in bf16 if the sampling consumer tolerates it.
    logits_flat = matmul_bias(h_bt.reshape(B * S, H).astype(jnp.bfloat16),
                              w_fc, params["b_fc"])          # (B*S, V)
    logits = logits_flat.reshape(B, S, V)
    return logits, (h_n[:, :B], c_n[:, :B])


# ----------------------------------------------------------------------------
# Pure-JAX f32 reference (mirrors torch semantics) for a correctness check.
# ----------------------------------------------------------------------------
def reference_forward(input_ids, params):
    emb_table = params["embedding"]
    L = params["num_layers"]
    H = params["hidden_dim"]
    x = jnp.take(emb_table, input_ids, axis=0)              # (B, S, E)
    B, S, _ = x.shape
    h = jnp.zeros((L, B, H), jnp.float32)
    c = jnp.zeros((L, B, H), jnp.float32)
    outs = []
    for t in range(S):
        inp = x[:, t, :]
        hs, cs = [], []
        for l in range(L):
            gates = (inp @ params["w_ih"][l] + h[l] @ params["w_hh"][l]
                     + params["b"][l])
            i_g = jax.nn.sigmoid(gates[:, :H])
            f_g = jax.nn.sigmoid(gates[:, H:2 * H])
            g_g = jnp.tanh(gates[:, 2 * H:3 * H])
            o_g = jax.nn.sigmoid(gates[:, 3 * H:])
            c_new = f_g * c[l] + i_g * g_g
            h_new = o_g * jnp.tanh(c_new)
            hs.append(h_new)
            cs.append(c_new)
            inp = h_new
        h = jnp.stack(hs)
        c = jnp.stack(cs)
        outs.append(inp)
    out = jnp.stack(outs, axis=1)                            # (B, S, H)
    logits = out @ params["w_fc"] + params["b_fc"]
    return logits, (h, c)


# ----------------------------------------------------------------------------
# Deterministic parameter construction (shapes per LSTMLanguageModel.__init__).
# ----------------------------------------------------------------------------
def make_params(key, vocab_size, embed_dim, hidden_dim, num_layers,
                pad_token_id=0):
    def init(k, shape, scale=0.1):
        return scale * jax.random.normal(k, shape, jnp.float32)

    keys = jax.random.split(key, 2 + 3 * num_layers + 2)
    ki = iter(keys)

    emb = init(next(ki), (vocab_size, embed_dim))
    emb = emb.at[pad_token_id].set(0.0)                      # padding_idx row

    w_ih, w_hh, b = [], [], []
    for l in range(num_layers):
        in_dim = embed_dim if l == 0 else hidden_dim
        # stored pre-transposed: x @ W_ih^T -> x @ w_ih with w_ih (in, 4H)
        w_ih.append(init(next(ki), (in_dim, 4 * hidden_dim)))
        w_hh.append(init(next(ki), (hidden_dim, 4 * hidden_dim)))
        b.append(init(next(ki), (1, 4 * hidden_dim)))        # b_ih + b_hh folded

    w_fc = init(next(ki), (hidden_dim, vocab_size))           # Linear weight^T
    b_fc = init(next(ki), (1, vocab_size))

    return {
        "embedding": emb,
        "w_ih": w_ih,
        "w_hh": w_hh,
        "b": b,
        "w_fc": w_fc,
        "b_fc": b_fc,
        "num_layers": num_layers,
        "hidden_dim": hidden_dim,
    }


if __name__ == "__main__":
    # Small, lane-friendly hyperparameters (H multiple of 128 keeps gate
    # slices lane-aligned; batch is padded to 8 sublanes only inside Stage 2).
    VOCAB, EMBED, HIDDEN, LAYERS = 512, 128, 128, 2
    BATCH, SEQ = 2, 16
    PAD_ID = 0

    key = jax.random.PRNGKey(0)
    k_params, k_ids = jax.random.split(key)
    params = make_params(k_params, VOCAB, EMBED, HIDDEN, LAYERS, PAD_ID)

    input_ids = jax.random.randint(k_ids, (BATCH, SEQ), 0, VOCAB, jnp.int32)

    logits, (h_n, c_n) = lstm_lm_forward(input_ids, params, time_block=16)
    jax.block_until_ready((logits, h_n, c_n))

    ref_logits, (ref_h, ref_c) = reference_forward(input_ids, params)

    assert logits.shape == (BATCH, SEQ, VOCAB)
    assert h_n.shape == (LAYERS, BATCH, HIDDEN)
    assert c_n.shape == (LAYERS, BATCH, HIDDEN)
    # bf16 MXU operands with f32 accumulation vs. the f32 reference:
    # tolerance relaxed accordingly (typical error is a few e-3).
    np.testing.assert_allclose(np.asarray(logits), np.asarray(ref_logits),
                               rtol=3e-2, atol=3e-2)
    np.testing.assert_allclose(np.asarray(h_n), np.asarray(ref_h),
                               rtol=3e-2, atol=3e-2)
    np.testing.assert_allclose(np.asarray(c_n), np.asarray(ref_c),
                               rtol=3e-2, atol=3e-2)

    print("KERNEL_OK")
</pallas_src>

<mosaic_0001>
module attributes {stable_mosaic.version = 11 : i64} {
  func.func @_matmul_bias_kernel(%arg0: i32, %arg1: i32, %arg2: memref<32x128xbf16, #tpu.memory_space<vmem>>, %arg3: memref<128x512xbf16, #tpu.memory_space<vmem>>, %arg4: memref<1x512xf32, #tpu.memory_space<vmem>>, %arg5: memref<32x512xf32, #tpu.memory_space<vmem>>) attributes {dimension_semantics = [#tpu.dimension_semantics<parallel>, #tpu.dimension_semantics<parallel>], iteration_bounds = array<i64: 1, 1>, scalar_prefetch = 0 : i64, scratch_operands = 0 : i64, tpu.core_type = #tpu.core_type<tc>, window_params = [{transform_indices = @transform_0, window_bounds = array<i64: 32, 128>}, {transform_indices = @transform_1, window_bounds = array<i64: 128, 512>}, {transform_indices = @transform_2, window_bounds = array<i64: 1, 512>}, {transform_indices = @transform_3, window_bounds = array<i64: 32, 512>}]} {
    %c0 = arith.constant 0 : index
    %c0_0 = arith.constant 0 : index
    %0 = vector.load %arg2[%c0, %c0_0] : memref<32x128xbf16, #tpu.memory_space<vmem>>, vector<32x128xbf16>
    %c0_1 = arith.constant 0 : index
    %c0_2 = arith.constant 0 : index
    %1 = vector.load %arg3[%c0_1, %c0_2] : memref<128x512xbf16, #tpu.memory_space<vmem>>, vector<128x512xbf16>
    %cst = arith.constant dense<0.000000e+00> : vector<32x512xf32>
    %2 = tpu.matmul %0, %1, %cst {dimension_numbers = #tpu.dot_dimension_numbers<[1], [0], [0], [1], [0, 0, 1, 1], [], []>} : vector<32x128xbf16>, vector<128x512xbf16>, vector<32x512xf32> -> vector<32x512xf32>
    %c0_3 = arith.constant 0 : index
    %c0_4 = arith.constant 0 : index
    %3 = vector.load %arg4[%c0_3, %c0_4] : memref<1x512xf32, #tpu.memory_space<vmem>>, vector<1x512xf32>
    %4 = vector.broadcast %3 : vector<1x512xf32> to vector<32x512xf32>
    %5 = arith.addf %2, %4 : vector<32x512xf32>
    %c0_5 = arith.constant 0 : index
    %c0_6 = arith.constant 0 : index
    %6 = vector.load %arg5[%c0_5, %c0_6] : memref<32x512xf32, #tpu.memory_space<vmem>>, vector<32x512xf32>
    tpu.vector_store %arg5[%c0_5, %c0_6], %5 {strides = array<i32>} : memref<32x512xf32, #tpu.memory_space<vmem>>, vector<32x512xf32>,
    return
  }
  func.func @transform_0(%arg0: i32, %arg1: i32) -> (i32, i32) {
    %c0_i32 = arith.constant 0 : i32
    %c0_i32_0 = arith.constant 0 : i32
    return %arg0, %c0_i32 : i32, i32
  }
  func.func @transform_1(%arg0: i32, %arg1: i32) -> (i32, i32) {
    %c0_i32 = arith.constant 0 : i32
    %c0_i32_0 = arith.constant 0 : i32
    return %c0_i32, %arg1 : i32, i32
  }
  func.func @transform_2(%arg0: i32, %arg1: i32) -> (i32, i32) {
    %c0_i32 = arith.constant 0 : i32
    %c0_i32_0 = arith.constant 0 : i32
    return %c0_i32, %arg1 : i32, i32
  }
  func.func @transform_3(%arg0: i32, %arg1: i32) -> (i32, i32) {
    %c0_i32 = arith.constant 0 : i32
    return %arg0, %arg1 : i32, i32
  }
}

</mosaic_0001>

<llo_original>
// kernel: tpu_custom_call.1
$region0: #{tpu_custom_call.1}
  #allocation0 [shape = 'u32[]', space=smem, size = 0x4, offset = 0x4, fixed_abs, tag = 'smem constant byte address 0x4 - core index']
  #allocation1 [shape = 'u32[144,128]{1,0:T(1,128)}', space=vmem, size = 0x12000, scoped, tag = 'internal scratch']
  %s0 = inlined_call_operand.hbm [shape: bf16[32,128], index: 0, kind: input, shape index: {}]
  %s1 = inlined_call_operand.hbm [shape: bf16[128,512], index: 1, kind: input, shape index: {}]
  %s2 = inlined_call_operand.vmem [shape: f32[1,512], index: 2, kind: input, shape index: {}]
  %s3 = inlined_call_operand.hbm [shape: f32[32,512], index: 3, kind: output, shape index: {}]
  %s4 = sld [smem:[#allocation0]]
  $region30: #{tpu_custom_call.1} parent=0
    _
  %s6 = ssub.s32 1, %s4
  %s7 = scalar_select 0, %s6, %s4
  $region1: #{tpu_custom_call.1} parent=0
    #allocation2 [shape = 'u8[8192]{0}', space=vmem, size = 0x2000, scoped, tag = 'input window, operand 0, single buffered']
    #allocation3 [shape = 's32[1]{0}', space=sflag, size = 0x4, scoped, tag = 'scoped memory for tpu_custom_call.1']
    #allocation4 [shape = 's32[1]{0}', space=sflag, size = 0x4, scoped, tag = 'scoped memory for tpu_custom_call.1']
    #allocation5 [shape = 'u8[131072]{0}', space=vmem, size = 0x20000, scoped, tag = 'input window, operand 1, single buffered']
    #allocation6 [shape = 's32[1]{0}', space=sflag, size = 0x4, scoped, tag = 'scoped memory for tpu_custom_call.1']
    #allocation7 [shape = 'u8[65536]{0}', space=vmem, size = 0x10000, scoped, tag = 'output window, operand 0, single buffered']
    %8 = vsyncpa [#allocation3], 0
    %9 = vsyncpa [#allocation6], 0
    %10 = vsyncpa [#allocation4], 0
    // Predicated region
    $region2: #{tpu_custom_call.1} parent=1 // pred_check
      _
    $region3: #{tpu_custom_call.1} parent=1 // pred_check_branch
      %12 = sbr.rel (0) target = $region5
    $region4: #{tpu_custom_call.1} parent=1 // pred_region
      %s14 = ssub.s32 256, 256
      %15 = vsyncadd [#allocation3], %s14
      %s16 = sshll.u32 [#allocation2], 4
      %s17 = int_to_ptr.vmem [resolvable:$true] %s16
      %22 = dma.hbm_to_vmem [thread:$0]  %s0, 256, %s17, [#allocation3], 64, 64, 4
    $region5: #{tpu_custom_call.1} parent=1 // pred_fallthru
      _
    // Predicated region
    $region6: #{tpu_custom_call.1} parent=1 // pred_check
      _
    $region7: #{tpu_custom_call.1} parent=1 // pred_check_branch
      %24 = sbr.rel (0) target = $region9
    $region8: #{tpu_custom_call.1} parent=1 // pred_region
      %s26 = ssub.s32 4096, 4096
      %27 = vsyncadd [#allocation6], %s26
      %s28 = sshll.u32 [#allocation5], 4
      %s29 = int_to_ptr.vmem [resolvable:$true] %s28
      %34 = dma.hbm_to_vmem [thread:$0]  %s1, 4096, %s29, [#allocation6], 256, 256, 16
    $region9: #{tpu_custom_call.1} parent=1 // pred_fallthru
      _
    // Predicated region
    $region10: #{tpu_custom_call.1} parent=1 // pred_check
      _
    $region11: #{tpu_custom_call.1} parent=1 // pred_check_branch
      %36 = sbr.rel (0) target = $region13
    $region12: #{tpu_custom_call.1} parent=1 // pred_region
      _
    $region13: #{tpu_custom_call.1} parent=1 // pred_fallthru
      _
    // Predicated region
    $region14: #{tpu_custom_call.1} parent=1 // pred_check
      _
    $region15: #{tpu_custom_call.1} parent=1 // pred_check_branch
      %38 = sbr.rel (0) target = $region17
    $region16: #{tpu_custom_call.1} parent=1 // pred_region
      %39 = dma.done [#allocation3], 256
    $region17: #{tpu_custom_call.1} parent=1 // pred_fallthru
      _
    // Predicated region
    $region18: #{tpu_custom_call.1} parent=1 // pred_check
      _
    $region19: #{tpu_custom_call.1} parent=1 // pred_check_branch
      %41 = sbr.rel (0) target = $region21
    $region20: #{tpu_custom_call.1} parent=1 // pred_region
      %42 = dma.done [#allocation6], 4096
    $region21: #{tpu_custom_call.1} parent=1 // pred_fallthru
      _
    %v44 = vld [vmem:[#allocation2] sm:$0xf]
    %v45 = vld [vmem:[#allocation2 + $0x4] sm:$0xf]
    %v46 = vld [vmem:[#allocation2 + $0x8] sm:$0xf]
    %v47 = vld [vmem:[#allocation2 + $0xc] sm:$0xf]
    %v48 = vld [vmem:[#allocation5] sm:$0xff]
    %v49 = vld [vmem:[#allocation5 + $0x8] sm:$0xff]
    %v50 = vld [vmem:[#allocation5 + $0x10] sm:$0xff]
    %v51 = vld [vmem:[#allocation5 + $0x18] sm:$0xff]
    %v52 = vld [vmem:[#allocation5 + $0x20] sm:$0xff]
    %v53 = vld [vmem:[#allocation5 + $0x28] sm:$0xff]
    %v54 = vld [vmem:[#allocation5 + $0x30] sm:$0xff]
    %v55 = vld [vmem:[#allocation5 + $0x38] sm:$0xff]
    %v56 = vld [vmem:[#allocation5 + $0x40] sm:$0xff]
    %v57 = vld [vmem:[#allocation5 + $0x48] sm:$0xff]
    %v58 = vld [vmem:[#allocation5 + $0x50] sm:$0xff]
    %v59 = vld [vmem:[#allocation5 + $0x58] sm:$0xff]
    %v60 = vld [vmem:[#allocation5 + $0x60] sm:$0xff]
    %v61 = vld [vmem:[#allocation5 + $0x68] sm:$0xff]
    %v62 = vld [vmem:[#allocation5 + $0x70] sm:$0xff]
    %v63 = vld [vmem:[#allocation5 + $0x78] sm:$0xff]
    %v64 = vld [vmem:[#allocation5 + $0x80] sm:$0xff]
    %v65 = vld [vmem:[#allocation5 + $0x88] sm:$0xff]
    %v66 = vld [vmem:[#allocation5 + $0x90] sm:$0xff]
    %v67 = vld [vmem:[#allocation5 + $0x98] sm:$0xff]
    %v68 = vld [vmem:[#allocation5 + $0xa0] sm:$0xff]
    %v69 = vld [vmem:[#allocation5 + $0xa8] sm:$0xff]
    %v70 = vld [vmem:[#allocation5 + $0xb0] sm:$0xff]
    %v71 = vld [vmem:[#allocation5 + $0xb8] sm:$0xff]
    %v72 = vld [vmem:[#allocation5 + $0xc0] sm:$0xff]
    %v73 = vld [vmem:[#allocation5 + $0xc8] sm:$0xff]
    %v74 = vld [vmem:[#allocation5 + $0xd0] sm:$0xff]
    %v75 = vld [vmem:[#allocation5 + $0xd8] sm:$0xff]
    %v76 = vld [vmem:[#allocation5 + $0xe0] sm:$0xff]
    %v77 = vld [vmem:[#allocation5 + $0xe8] sm:$0xff]
    %v78 = vld [vmem:[#allocation5 + $0xf0] sm:$0xff]
    %v79 = vld [vmem:[#allocation5 + $0xf8] sm:$0xff]
    %v80 = vld [vmem:[%s2] sm:$0xf]
    %v82 = vlaneseq
    %v83 = vshrl.u32 %v82, 7
    %v84 = vsub.s32 0, %v83
    %v85 = vrot.slane %v80, %v84
    %v86 = vlaneseq
    %v87 = vshrl.u32 %v86, 7
    %v88 = vsub.s32 1, %v87
    %v89 = vrot.slane %v80, %v88
    %v90 = vlaneseq
    %v91 = vshrl.u32 %v90, 7
    %v92 = vsub.s32 2, %v91
    %v93 = vrot.slane %v80, %v92
    %v94 = vlaneseq
    %v95 = vshrl.u32 %v94, 7
    %v96 = vsub.s32 3, %v95
    %v97 = vrot.slane %v80, %v96
    %v106 = vunpack.c.l.b16 %v44
    %v107 = vunpack.c.l.b16 %v45
    %v108 = vunpack.c.l.b16 %v46
    %v109 = vunpack.c.l.b16 %v47
    %v110 = vpack.c.b16 %v107, %v106
    %v111 = vpack.c.b16 %v109, %v108
    %v146 = vunpack.c.l.b16 %v48
    %v147 = vunpack.c.h.b16 %v48
    %v148 = vunpack.c.l.b16 %v49
    %v149 = vunpack.c.h.b16 %v49
    %v150 = vunpack.c.l.b16 %v50
    %v151 = vunpack.c.h.b16 %v50
    %v152 = vunpack.c.l.b16 %v51
    %v153 = vunpack.c.h.b16 %v51
    %v154 = vunpack.c.l.b16 %v52
    %v155 = vunpack.c.h.b16 %v52
    %v156 = vunpack.c.l.b16 %v53
    %v157 = vunpack.c.h.b16 %v53
    %v158 = vunpack.c.l.b16 %v54
    %v159 = vunpack.c.h.b16 %v54
    %v160 = vunpack.c.l.b16 %v55
    %v161 = vunpack.c.h.b16 %v55
    %v162 = vunpack.c.l.b16 %v56
    %v163 = vunpack.c.h.b16 %v56
    %v164 = vunpack.c.l.b16 %v57
    %v165 = vunpack.c.h.b16 %v57
    %v166 = vunpack.c.l.b16 %v58
    %v167 = vunpack.c.h.b16 %v58
    %v168 = vunpack.c.l.b16 %v59
    %v169 = vunpack.c.h.b16 %v59
    %v170 = vunpack.c.l.b16 %v60
    %v171 = vunpack.c.h.b16 %v60
    %v172 = vunpack.c.l.b16 %v61
    %v173 = vunpack.c.h.b16 %v61
    %v174 = vunpack.c.l.b16 %v62
    %v175 = vunpack.c.h.b16 %v62
    %v176 = vunpack.c.l.b16 %v63
    %v177 = vunpack.c.h.b16 %v63
    %v178 = vunpack.c.l.b16 %v64
    %v179 = vunpack.c.h.b16 %v64
    %v180 = vunpack.c.l.b16 %v65
    %v181 = vunpack.c.h.b16 %v65
    %v182 = vunpack.c.l.b16 %v66
    %v183 = vunpack.c.h.b16 %v66
    %v184 = vunpack.c.l.b16 %v67
    %v185 = vunpack.c.h.b16 %v67
    %v186 = vunpack.c.l.b16 %v68
    %v187 = vunpack.c.h.b16 %v68
    %v188 = vunpack.c.l.b16 %v69
    %v189 = vunpack.c.h.b16 %v69
    %v190 = vunpack.c.l.b16 %v70
    %v191 = vunpack.c.h.b16 %v70
    %v192 = vunpack.c.l.b16 %v71
    %v193 = vunpack.c.h.b16 %v71
    %v194 = vunpack.c.l.b16 %v72
    %v195 = vunpack.c.h.b16 %v72
    %v196 = vunpack.c.l.b16 %v73
    %v197 = vunpack.c.h.b16 %v73
    %v198 = vunpack.c.l.b16 %v74
    %v199 = vunpack.c.h.b16 %v74
    %v200 = vunpack.c.l.b16 %v75
    %v201 = vunpack.c.h.b16 %v75
    %v202 = vunpack.c.l.b16 %v76
    %v203 = vunpack.c.h.b16 %v76
    %v204 = vunpack.c.l.b16 %v77
    %v205 = vunpack.c.h.b16 %v77
    %v206 = vunpack.c.l.b16 %v78
    %v207 = vunpack.c.h.b16 %v78
    %v208 = vunpack.c.l.b16 %v79
    %v209 = vunpack.c.h.b16 %v79
    %v210 = vpack.c.b16 %v150, %v146
    %v211 = vpack.c.b16 %v151, %v147
    %v212 = vpack.c.b16 %v152, %v148
    %v213 = vpack.c.b16 %v153, %v149
    %v214 = vpack.c.b16 %v158, %v154
    %v215 = vpack.c.b16 %v159, %v155
    %v216 = vpack.c.b16 %v160, %v156
    %v217 = vpack.c.b16 %v161, %v157
    %v218 = vpack.c.b16 %v166, %v162
    %v219 = vpack.c.b16 %v167, %v163
    %v220 = vpack.c.b16 %v168, %v164
    %v221 = vpack.c.b16 %v169, %v165
    %v222 = vpack.c.b16 %v174, %v170
    %v223 = vpack.c.b16 %v175, %v171
    %v224 = vpack.c.b16 %v176, %v172
    %v225 = vpack.c.b16 %v177, %v173
    %v226 = vpack.c.b16 %v182, %v178
    %v227 = vpack.c.b16 %v183, %v179
    %v228 = vpack.c.b16 %v184, %v180
    %v229 = vpack.c.b16 %v185, %v181
    %v230 = vpack.c.b16 %v190, %v186
    %v231 = vpack.c.b16 %v191, %v187
    %v232 = vpack.c.b16 %v192, %v188
    %v233 = vpack.c.b16 %v193, %v189
    %v234 = vpack.c.b16 %v198, %v194
    %v235 = vpack.c.b16 %v199, %v195
    %v236 = vpack.c.b16 %v200, %v196
    %v237 = vpack.c.b16 %v201, %v197
    %v238 = vpack.c.b16 %v206, %v202
    %v239 = vpack.c.b16 %v207, %v203
    %v240 = vpack.c.b16 %v208, %v204
    %v241 = vpack.c.b16 %v209, %v205
    %274 = vmatprep.subr.bf16.mxu0 %v211
    %275 = vmatpush1.bf16.msra.mxu0 %v210
    %276 = vmatprep.subr.bf16.mxu0 %v215
    %277 = vmatpush1.bf16.msra.mxu0 %v214
    %278 = vmatprep.subr.bf16.mxu0 %v219
    %279 = vmatpush1.bf16.msra.mxu0 %v218
    %280 = vmatprep.subr.bf16.mxu0 %v223
    %281 = vmatpush1.bf16.msra.mxu0 %v222
    %282 = vmatprep.subr.bf16.mxu0 %v227
    %283 = vmatpush1.bf16.msra.mxu0 %v226
    %284 = vmatprep.subr.bf16.mxu0 %v231
    %285 = vmatpush1.bf16.msra.mxu0 %v230
    %286 = vmatprep.subr.bf16.mxu0 %v235
    %287 = vmatpush1.bf16.msra.mxu0 %v234
    %288 = vmatprep.subr.bf16.mxu0 %v239
    %289 = vmatpush1.bf16.msra.mxu0 %v238
    %290 = vmatprep.subr.bf16.mxu0 0
    %291 = vmatpush1.bf16.msra.mxu0 0
    %292 = vmatprep.subr.bf16.mxu0 0
    %293 = vmatpush1.bf16.msra.mxu0 0
    %294 = vmatprep.subr.bf16.mxu0 0
    %295 = vmatpush1.bf16.msra.mxu0 0
    %296 = vmatprep.subr.bf16.mxu0 0
    %297 = vmatpush1.bf16.msra.mxu0 0
    %298 = vmatprep.subr.bf16.mxu0 0
    %299 = vmatpush1.bf16.msra.mxu0 0
    %300 = vmatprep.subr.bf16.mxu0 0
    %301 = vmatpush1.bf16.msra.mxu0 0
    %302 = vmatprep.subr.bf16.mxu0 0
    %303 = vmatpush1.bf16.msra.mxu0 0
    %304 = vmatprep.subr.bf16.mxu0 0
    %305 = vmatpush1.bf16.msra.mxu0 0
    %306 = vmatprep.mubr.bf16.mxu0 0
    %307 = vmatmul.mubr.bf16.gmra.mrb[0].mxu0 %v110
    %v308 = vpop.f32.mrb[0].mxu0
    %v309 = vadd.f32 %v85, %v308
    %v310 = vpop.f32.mrb[0].mxu0
    %v311 = vadd.f32 %v89, %v310
    %v312 = vpop.f32.mrb[0].mxu0
    %v313 = vadd.f32 %v85, %v312
    %v314 = vpop.f32.mrb[0].mxu0
    %v315 = vadd.f32 %v89, %v314
    %316 = vmatprep.mubr.bf16.mxu0 0
    %317 = vmatmul.mubr.bf16.gmra.mrb[0].mxu0 %v111
    %v318 = vpop.f32.mrb[0].mxu0
    %v319 = vadd.f32 %v85, %v318
    %v320 = vpop.f32.mrb[0].mxu0
    %v321 = vadd.f32 %v89, %v320
    %v322 = vpop.f32.mrb[0].mxu0
    %v323 = vadd.f32 %v85, %v322
    %v324 = vpop.f32.mrb[0].mxu0
    %v325 = vadd.f32 %v89, %v324
    %326 = vdwg.mxu0
    %327 = vmatprep.subr.bf16.mxu0 %v213
    %328 = vmatpush1.bf16.msra.mxu0 %v212
    %329 = vmatprep.subr.bf16.mxu0 %v217
    %330 = vmatpush1.bf16.msra.mxu0 %v216
    %331 = vmatprep.subr.bf16.mxu0 %v221
    %332 = vmatpush1.bf16.msra.mxu0 %v220
    %333 = vmatprep.subr.bf16.mxu0 %v225
    %334 = vmatpush1.bf16.msra.mxu0 %v224
    %335 = vmatprep.subr.bf16.mxu0 %v229
    %336 = vmatpush1.bf16.msra.mxu0 %v228
    %337 = vmatprep.subr.bf16.mxu0 %v233
    %338 = vmatpush1.bf16.msra.mxu0 %v232
    %339 = vmatprep.subr.bf16.mxu0 %v237
    %340 = vmatpush1.bf16.msra.mxu0 %v236
    %341 = vmatprep.subr.bf16.mxu0 %v241
    %342 = vmatpush1.bf16.msra.mxu0 %v240
    %343 = vmatprep.subr.bf16.mxu0 0
    %344 = vmatpush1.bf16.msra.mxu0 0
    %345 = vmatprep.subr.bf16.mxu0 0
    %346 = vmatpush1.bf16.msra.mxu0 0
    %347 = vmatprep.subr.bf16.mxu0 0
    %348 = vmatpush1.bf16.msra.mxu0 0
    %349 = vmatprep.subr.bf16.mxu0 0
    %350 = vmatpush1.bf16.msra.mxu0 0
    %351 = vmatprep.subr.bf16.mxu0 0
    %352 = vmatpush1.bf16.msra.mxu0 0
    %353 = vmatprep.subr.bf16.mxu0 0
    %354 = vmatpush1.bf16.msra.mxu0 0
    %355 = vmatprep.subr.bf16.mxu0 0
    %356 = vmatpush1.bf16.msra.mxu0 0
    %357 = vmatprep.subr.bf16.mxu0 0
    %358 = vmatpush1.bf16.msra.mxu0 0
    %359 = vmatprep.mubr.bf16.mxu0 0
    %360 = vmatmul.mubr.bf16.gmra.mrb[0].mxu0 %v110
    %v361 = vpop.f32.mrb[0].mxu0
    %v362 = vadd.f32 %v93, %v361
    %v363 = vpop.f32.mrb[0].mxu0
    %v364 = vadd.f32 %v97, %v363
    %v365 = vpop.f32.mrb[0].mxu0
    %v366 = vadd.f32 %v93, %v365
    %v367 = vpop.f32.mrb[0].mxu0
    %v368 = vadd.f32 %v97, %v367
    %369 = vmatprep.mubr.bf16.mxu0 0
    %370 = vmatmul.mubr.bf16.gmra.mrb[0].mxu0 %v111
    %v371 = vpop.f32.mrb[0].mxu0
    %v372 = vadd.f32 %v93, %v371
    %v373 = vpop.f32.mrb[0].mxu0
    %v374 = vadd.f32 %v97, %v373
    %v375 = vpop.f32.mrb[0].mxu0
    %v376 = vadd.f32 %v93, %v375
    %v377 = vpop.f32.mrb[0].mxu0
    %v378 = vadd.f32 %v97, %v377
    %379 = vdwg.mxu0
    %380 = vst [vmem:[#allocation7] sm:$0xff] %v309
    %381 = vst [vmem:[#allocation7 + $0x8] sm:$0xff] %v311
    %382 = vst [vmem:[#allocation7 + $0x10] sm:$0xff] %v362
    %383 = vst [vmem:[#allocation7 + $0x18] sm:$0xff] %v364
    %384 = vst [vmem:[#allocation7 + $0x20] sm:$0xff] %v313
    %385 = vst [vmem:[#allocation7 + $0x28] sm:$0xff] %v315
    %386 = vst [vmem:[#allocation7 + $0x30] sm:$0xff] %v366
    %387 = vst [vmem:[#allocation7 + $0x38] sm:$0xff] %v368
    %388 = vst [vmem:[#allocation7 + $0x40] sm:$0xff] %v319
    %389 = vst [vmem:[#allocation7 + $0x48] sm:$0xff] %v321
    %390 = vst [vmem:[#allocation7 + $0x50] sm:$0xff] %v372
    %391 = vst [vmem:[#allocation7 + $0x58] sm:$0xff] %v374
    %392 = vst [vmem:[#allocation7 + $0x60] sm:$0xff] %v323
    %393 = vst [vmem:[#allocation7 + $0x68] sm:$0xff] %v325
    %394 = vst [vmem:[#allocation7 + $0x70] sm:$0xff] %v376
    %395 = vst [vmem:[#allocation7 + $0x78] sm:$0xff] %v378
    // Predicated region
    $region22: #{tpu_custom_call.1} parent=1 // pred_check
      _
    $region23: #{tpu_custom_call.1} parent=1 // pred_check_branch
      %397 = sbr.rel (0) target = $region25
    $region24: #{tpu_custom_call.1} parent=1 // pred_region
      %s399 = ssub.s32 2048, 2048
      %400 = vsyncadd [#allocation4], %s399
      %s401 = sshll.u32 [#allocation7], 4
      %s402 = int_to_ptr.vmem [resolvable:$true] %s401
      %407 = dma.vmem_to_hbm [thread:$0]  %s402, 2048, %s3, [#allocation4], 512, 512, 32
    $region25: #{tpu_custom_call.1} parent=1 // pred_fallthru
      _
    // Predicated region
    $region26: #{tpu_custom_call.1} parent=1 // pred_check
      _
    $region27: #{tpu_custom_call.1} parent=1 // pred_check_branch
      %409 = sbr.rel (0) target = $region29
    $region28: #{tpu_custom_call.1} parent=1 // pred_region
      %410 = dma.done [#allocation4], 2048
    $region29: #{tpu_custom_call.1} parent=1 // pred_fallthru
      _
    %411 = vsyncpa [#allocation3], 1
    %412 = vsyncpa [#allocation6], 1
    %413 = vsyncpa [#allocation4], 1

</llo_original>
